<compile_context>
chip_gen: v7x
topology: tpu7x:2x2x1
jax: 0.10.0
libtpu: 0.0.40
codegen_flags: <defaults>
</compile_context>

<pallas_src>
import jax
import jax.numpy as jnp
from jax.experimental import pallas as pl
from jax.experimental.pallas import tpu as pltpu


def _mixloss_kernel(logits_ref, feats_ref, tgt_ref, center_ref,
                    ce_out_ref, dist_out_ref):
    # ---- cross-entropy rows ----
    logits = logits_ref[...]                                            # (TB, C)
    m = jnp.max(logits, axis=1, keepdims=True)                          # (TB, 1)
    shifted = logits - m
    lse = jnp.log(jnp.sum(jnp.exp(shifted), axis=1, keepdims=True))     # (TB, 1)
    class_ids = jax.lax.broadcasted_iota(jnp.int32, logits.shape, 1)    # (TB, C)
    onehot = (class_ids == tgt_ref[...]).astype(jnp.float32)            # (TB, C)
    picked = jnp.sum(onehot * shifted, axis=1, keepdims=True)           # (TB, 1)
    ce_rows = lse - picked                                               # (TB, 1)

    # ---- target-center "gather" as one-hot @ center on the MXU (center resident in VMEM) ----
    te = jnp.dot(onehot, center_ref[...], preferred_element_type=jnp.float32)  # (TB, D)

    # ---- |cosine| term, fused into a single rsqrt ----
    feats = feats_ref[...]                                               # (TB, D)
    aa = jnp.sum(feats * feats, axis=1, keepdims=True)                   # (TB, 1)
    bb = jnp.sum(te * te, axis=1, keepdims=True)                         # (TB, 1)
    cos = jnp.sum(feats * te, axis=1, keepdims=True)                     # (TB, 1)
    dist = jnp.abs(cos) * jax.lax.rsqrt((aa + 1e-6) * (bb + 1e-6))       # (TB, 1)

    # ---- per-tile partial sums; the mean / combine is done in the wrapper ----
    ce_out_ref[...] = jnp.sum(ce_rows).reshape(1, 1, 1)
    dist_out_ref[...] = jnp.sum(dist).reshape(1, 1, 1)


def _vmem_budget_bytes():
    """~75% of physical VMEM, capped at 96 MiB (v5e/v6e -> 96 MiB, v7x -> 48 MiB)."""
    try:
        phys = pltpu.get_tpu_info().vmem_capacity_bytes
    except Exception:
        phys = 64 * 1024 * 1024          # v7x-safe fallback
    return min(int(phys) * 3 // 4, 96 * 1024 * 1024)


def _pick_tile_b(B, C, D, budget_bytes):
    """Largest sublane-aligned batch tile whose double-buffered blocks fit the VMEM budget."""
    per_row = 2 * 4 * (C + D + 1)                 # logits + feats + targets, x2 buffers, f32
    fixed = 2 * C * D * 4                         # resident center (count both buffers)
    usable = max(budget_bytes // 2 - fixed, budget_bytes // 4)   # headroom for temporaries
    cap = min(max(usable // per_row, 8), B)
    if B <= cap:
        return B
    best = None
    for t in range(8, cap + 1, 8):                # prefer multiples of 8 (sublane alignment)
        if B % t == 0:
            best = t
    if best is not None:
        return best
    # TODO(synk): pad the batch so a sublane-aligned divisor exists; fall back to full B.
    return B


def mix_loss(outputs, features, center, targets, *, tile_b=None):
    """outputs (B,C) f32, features (B,D) f32, center (C,D), targets (B,) int -> scalar f32."""
    outputs = outputs.astype(jnp.float32)
    features = features.astype(jnp.float32)
    center = center.astype(jnp.float32)           # matches target_embedding.float()
    targets = targets.astype(jnp.int32)

    B, C = outputs.shape
    Bf, D = features.shape
    assert B == Bf, "outputs/features batch mismatch"
    assert center.shape == (C, D), "center must be (num_classes, feature_dim)"

    budget = _vmem_budget_bytes()
    assert 2 * C * D * 4 < budget, (
        "center table too large to keep resident in VMEM "
        "(TODO(synk): stream center / add a class-axis grid for very large C)")

    if tile_b is None:
        tile_b = _pick_tile_b(B, C, D, budget)
    assert B % tile_b == 0, "batch must be divisible by the batch tile"
    num_tiles = B // tile_b

    partial = jax.ShapeDtypeStruct((num_tiles, 1, 1), jnp.float32)

    grid_spec = pltpu.PrefetchScalarGridSpec(
        num_scalar_prefetch=0,
        grid=(num_tiles,),
        in_specs=[
            pl.BlockSpec((tile_b, C), lambda i: (i, 0)),   # logits tile
            pl.BlockSpec((tile_b, D), lambda i: (i, 0)),   # features tile
            pl.BlockSpec((tile_b, 1), lambda i: (i, 0)),   # targets as (B,1) for the one-hot
            pl.BlockSpec((C, D), lambda i: (0, 0)),        # center resident in VMEM
        ],
        out_specs=[
            pl.BlockSpec((1, 1, 1), lambda i: (i, 0, 0)),  # per-tile CE partial sum
            pl.BlockSpec((1, 1, 1), lambda i: (i, 0, 0)),  # per-tile dist partial sum
        ],
    )

    ce_part, dist_part = pl.pallas_call(
        _mixloss_kernel,
        out_shape=(partial, partial),
        grid_spec=grid_spec,
        compiler_params=pltpu.CompilerParams(
            dimension_semantics=("parallel",),             # tiles independent -> megacore on v7x
            vmem_limit_bytes=budget,
        ),
    )(outputs, features, targets.reshape(B, 1), center)

    inv_b = 1.0 / float(B)
    ce_mean = jnp.sum(ce_part) * inv_b
    dist_mean = jnp.sum(dist_part) * inv_b
    # mean(ce_scalar * (0.5 + 0.5*dist_i)) == ce_mean * (0.5 + 0.5*mean(dist))
    return ce_mean * (0.5 + 0.5 * dist_mean)


def _ref_mix_loss(outputs, features, center, targets):
    # pure-JAX reference mirroring the PyTorch MixLoss.forward
    lse = jax.scipy.special.logsumexp(outputs, axis=1)
    picked = jnp.take_along_axis(outputs, targets[:, None], axis=1)[:, 0]
    ce = jnp.mean(lse - picked)
    tgt_emb = center[targets].astype(jnp.float32)
    a = jnp.sqrt(jnp.sum(features * features, axis=1) + 1e-6)
    b = jnp.sqrt(jnp.sum(tgt_emb * tgt_emb, axis=1) + 1e-6)
    cos = jnp.sum(features * tgt_emb, axis=1)
    dist = jnp.abs(cos / (a * b))
    return jnp.mean(ce * (0.5 + 0.5 * dist))


if __name__ == "__main__":
    B, C, D = 8, 4, 32  # batch, num classes, embedding dim

    key = jax.random.PRNGKey(0)
    k_out, k_feat, k_center, k_tgt = jax.random.split(key, 4)

    outputs = jax.random.normal(k_out, (B, C), dtype=jnp.float32)
    features = jax.random.normal(k_feat, (B, D), dtype=jnp.float32)
    center = jax.random.normal(k_center, (C, D), dtype=jnp.float32)
    targets = jax.random.randint(k_tgt, (B,), 0, C, dtype=jnp.int32)

    loss = jax.block_until_ready(mix_loss(outputs, features, center, targets))
    ref = jax.block_until_ready(_ref_mix_loss(outputs, features, center, targets))
    assert jnp.allclose(loss, ref, rtol=1e-5, atol=1e-5), (loss, ref)
    print("KERNEL_OK")
</pallas_src>

<mosaic_0001>
module attributes {stable_mosaic.version = 11 : i64} {
  func.func @_mixloss_kernel(%arg0: i32, %arg1: memref<8x4xf32, #tpu.memory_space<vmem>>, %arg2: memref<8x32xf32, #tpu.memory_space<vmem>>, %arg3: memref<8x1xi32, #tpu.memory_space<vmem>>, %arg4: memref<4x32xf32, #tpu.memory_space<vmem>>, %arg5: memref<1x1x1xf32, #tpu.memory_space<vmem>>, %arg6: memref<1x1x1xf32, #tpu.memory_space<vmem>>) attributes {dimension_semantics = [#tpu.dimension_semantics<parallel>], iteration_bounds = array<i64: 1>, scalar_prefetch = 0 : i64, scratch_operands = 0 : i64, tpu.core_type = #tpu.core_type<tc>, window_params = [{transform_indices = @transform_0, window_bounds = array<i64: 8, 4>}, {transform_indices = @transform_1, window_bounds = array<i64: 8, 32>}, {transform_indices = @transform_2, window_bounds = array<i64: 8, 1>}, {pipeline_mode = #tpu.pipeline_mode<synchronous>, transform_indices = @transform_3, window_bounds = array<i64: 4, 32>}, {transform_indices = @transform_4, window_bounds = array<i64: 1, 1, 1>}, {transform_indices = @transform_5, window_bounds = array<i64: 1, 1, 1>}]} {
    %c0 = arith.constant 0 : index
    %c0_0 = arith.constant 0 : index
    %0 = vector.load %arg1[%c0, %c0_0] : memref<8x4xf32, #tpu.memory_space<vmem>>, vector<8x4xf32>
    %cst = arith.constant dense<0xFF800000> : vector<8xf32>
    %1 = vector.multi_reduction <maximumf>, %0, %cst [1] : vector<8x4xf32> to vector<8xf32>
    %2 = vector.shape_cast %1 : vector<8xf32> to vector<8x1xf32>
    %3 = vector.broadcast %2 : vector<8x1xf32> to vector<8x4xf32>
    %4 = arith.subf %0, %3 : vector<8x4xf32>
    %5 = math.exp %4 : vector<8x4xf32>
    %cst_1 = arith.constant dense<0.000000e+00> : vector<8xf32>
    %6 = vector.multi_reduction <add>, %5, %cst_1 [1] : vector<8x4xf32> to vector<8xf32>
    %7 = vector.shape_cast %6 : vector<8xf32> to vector<8x1xf32>
    %8 = math.log %7 : vector<8x1xf32>
    %9 = tpu.iota {dimensions = array<i32: 1>} : vector<8x4xi32>
    %c0_2 = arith.constant 0 : index
    %c0_3 = arith.constant 0 : index
    %10 = vector.load %arg3[%c0_2, %c0_3] : memref<8x1xi32, #tpu.memory_space<vmem>>, vector<8x1xi32>
    %11 = vector.broadcast %10 : vector<8x1xi32> to vector<8x4xi32>
    %12 = arith.cmpi eq, %9, %11 : vector<8x4xi32>
    %13 = arith.extui %12 : vector<8x4xi1> to vector<8x4xi32>
    %14 = arith.sitofp %13 : vector<8x4xi32> to vector<8x4xf32>
    %15 = arith.mulf %14, %4 : vector<8x4xf32>
    %cst_4 = arith.constant dense<0.000000e+00> : vector<8xf32>
    %16 = vector.multi_reduction <add>, %15, %cst_4 [1] : vector<8x4xf32> to vector<8xf32>
    %17 = vector.shape_cast %16 : vector<8xf32> to vector<8x1xf32>
    %18 = arith.subf %8, %17 : vector<8x1xf32>
    %c0_5 = arith.constant 0 : index
    %c0_6 = arith.constant 0 : index
    %19 = vector.load %arg4[%c0_5, %c0_6] : memref<4x32xf32, #tpu.memory_space<vmem>>, vector<4x32xf32>
    %cst_7 = arith.constant dense<0.000000e+00> : vector<8x32xf32>
    %20 = tpu.matmul %14, %19, %cst_7 {dimension_numbers = #tpu.dot_dimension_numbers<[1], [0], [0], [1], [0, 0, 1, 1], [], []>} : vector<8x4xf32>, vector<4x32xf32>, vector<8x32xf32> -> vector<8x32xf32>
    %c0_8 = arith.constant 0 : index
    %c0_9 = arith.constant 0 : index
    %21 = vector.load %arg2[%c0_8, %c0_9] : memref<8x32xf32, #tpu.memory_space<vmem>>, vector<8x32xf32>
    %22 = arith.mulf %21, %21 : vector<8x32xf32>
    %cst_10 = arith.constant dense<0.000000e+00> : vector<8xf32>
    %23 = vector.multi_reduction <add>, %22, %cst_10 [1] : vector<8x32xf32> to vector<8xf32>
    %24 = vector.shape_cast %23 : vector<8xf32> to vector<8x1xf32>
    %25 = arith.mulf %20, %20 : vector<8x32xf32>
    %cst_11 = arith.constant dense<0.000000e+00> : vector<8xf32>
    %26 = vector.multi_reduction <add>, %25, %cst_11 [1] : vector<8x32xf32> to vector<8xf32>
    %27 = vector.shape_cast %26 : vector<8xf32> to vector<8x1xf32>
    %28 = arith.mulf %21, %20 : vector<8x32xf32>
    %cst_12 = arith.constant dense<0.000000e+00> : vector<8xf32>
    %29 = vector.multi_reduction <add>, %28, %cst_12 [1] : vector<8x32xf32> to vector<8xf32>
    %30 = vector.shape_cast %29 : vector<8xf32> to vector<8x1xf32>
    %31 = math.absf %30 : vector<8x1xf32>
    %cst_13 = arith.constant 9.99999997E-7 : f32
    %32 = vector.broadcast %cst_13 : f32 to vector<8x1xf32>
    %33 = arith.addf %24, %32 : vector<8x1xf32>
    %cst_14 = arith.constant 9.99999997E-7 : f32
    %34 = vector.broadcast %cst_14 : f32 to vector<8x1xf32>
    %35 = arith.addf %27, %34 : vector<8x1xf32>
    %36 = arith.mulf %33, %35 : vector<8x1xf32>
    %37 = math.rsqrt %36 : vector<8x1xf32>
    %38 = arith.mulf %31, %37 : vector<8x1xf32>
    %39 = vector.shape_cast %18 : vector<8x1xf32> to vector<1x8x1xf32>
    %cst_15 = arith.constant dense<0.000000e+00> : vector<1xf32>
    %40 = vector.multi_reduction <add>, %39, %cst_15 [1, 2] : vector<1x8x1xf32> to vector<1xf32>
    %41 = vector.shape_cast %40 : vector<1xf32> to vector<1x1x1xf32>
    %42 = vector.extract %41[0, 0, 0] : f32 from vector<1x1x1xf32>
    %43 = vector.broadcast %42 : f32 to vector<1x1x1xf32>
    %c0_16 = arith.constant 0 : index
    %c0_17 = arith.constant 0 : index
    %c0_18 = arith.constant 0 : index
    %44 = vector.load %arg5[%c0_16, %c0_17, %c0_18] : memref<1x1x1xf32, #tpu.memory_space<vmem>>, vector<1x1x1xf32>
    tpu.vector_store %arg5[%c0_16, %c0_17, %c0_18], %43 {strides = array<i32>} : memref<1x1x1xf32, #tpu.memory_space<vmem>>, vector<1x1x1xf32>,
    %45 = vector.shape_cast %38 : vector<8x1xf32> to vector<1x8x1xf32>
    %cst_19 = arith.constant dense<0.000000e+00> : vector<1xf32>
    %46 = vector.multi_reduction <add>, %45, %cst_19 [1, 2] : vector<1x8x1xf32> to vector<1xf32>
    %47 = vector.shape_cast %46 : vector<1xf32> to vector<1x1x1xf32>
    %48 = vector.extract %47[0, 0, 0] : f32 from vector<1x1x1xf32>
    %49 = vector.broadcast %48 : f32 to vector<1x1x1xf32>
    %c0_20 = arith.constant 0 : index
    %c0_21 = arith.constant 0 : index
    %c0_22 = arith.constant 0 : index
    %50 = vector.load %arg6[%c0_20, %c0_21, %c0_22] : memref<1x1x1xf32, #tpu.memory_space<vmem>>, vector<1x1x1xf32>
    tpu.vector_store %arg6[%c0_20, %c0_21, %c0_22], %49 {strides = array<i32>} : memref<1x1x1xf32, #tpu.memory_space<vmem>>, vector<1x1x1xf32>,
    return
  }
  func.func @transform_0(%arg0: i32) -> (i32, i32) {
    %c0_i32 = arith.constant 0 : i32
    %c0_i32_0 = arith.constant 0 : i32
    return %arg0, %c0_i32 : i32, i32
  }
  func.func @transform_1(%arg0: i32) -> (i32, i32) {
    %c0_i32 = arith.constant 0 : i32
    %c0_i32_0 = arith.constant 0 : i32
    return %arg0, %c0_i32 : i32, i32
  }
  func.func @transform_2(%arg0: i32) -> (i32, i32) {
    %c0_i32 = arith.constant 0 : i32
    %c0_i32_0 = arith.constant 0 : i32
    return %arg0, %c0_i32 : i32, i32
  }
  func.func @transform_3(%arg0: i32) -> (i32, i32) {
    %c0_i32 = arith.constant 0 : i32
    %c0_i32_0 = arith.constant 0 : i32
    %c0_i32_1 = arith.constant 0 : i32
    return %c0_i32, %c0_i32_0 : i32, i32
  }
  func.func @transform_4(%arg0: i32) -> (i32, i32, i32) {
    %c0_i32 = arith.constant 0 : i32
    %c0_i32_0 = arith.constant 0 : i32
    %c0_i32_1 = arith.constant 0 : i32
    return %arg0, %c0_i32, %c0_i32_0 : i32, i32, i32
  }
  func.func @transform_5(%arg0: i32) -> (i32, i32, i32) {
    %c0_i32 = arith.constant 0 : i32
    %c0_i32_0 = arith.constant 0 : i32
    %c0_i32_1 = arith.constant 0 : i32
    return %arg0, %c0_i32, %c0_i32_0 : i32, i32, i32
  }
}

</mosaic_0001>

<llo_original>
// kernel: tpu_custom_call.1
$region0: #{tpu_custom_call.1}
  #allocation0 [shape = 'u32[]', space=smem, size = 0x4, offset = 0x4, fixed_abs, tag = 'smem constant byte address 0x4 - core index']
  #allocation1 [shape = 'u32[144,128]{1,0:T(1,128)}', space=vmem, size = 0x12000, scoped, tag = 'internal scratch']
  %s0 = inlined_call_operand.vmem [shape: f32[8,4], index: 0, kind: input, shape index: {}]
  %s1 = inlined_call_operand.vmem [shape: f32[8,32], index: 1, kind: input, shape index: {}]
  %s2 = inlined_call_operand.vmem [shape: s32[8,1], index: 2, kind: input, shape index: {}]
  %s3 = inlined_call_operand.vmem [shape: f32[4,32], index: 3, kind: input, shape index: {}]
  %s4 = inlined_call_operand.hbm [shape: f32[1,1,1], index: 4, kind: output, shape index: {0}]
  %s5 = inlined_call_operand.hbm [shape: f32[1,1,1], index: 5, kind: output, shape index: {1}]
  %6 = xla_tuple %s4, %s5
  %s7 = sld [smem:[#allocation0]]
  $region34: #{tpu_custom_call.1} parent=0
    _
  %s9 = ssub.s32 1, %s7
  %s10 = scalar_select 0, %s9, %s7
  $region1: #{tpu_custom_call.1} parent=0
    #allocation2 [shape = 'u8[512]{0}', space=vmem, size = 0x400, scoped, tag = 'output window, operand 0, single buffered']
    #allocation3 [shape = 's32[1]{0}', space=sflag, size = 0x4, scoped, tag = 'scoped memory for tpu_custom_call.1']
    #allocation4 [shape = 'u8[512]{0}', space=vmem, size = 0x400, scoped, tag = 'output window, operand 1, single buffered']
    #allocation5 [shape = 's32[1]{0}', space=sflag, size = 0x4, scoped, tag = 'scoped memory for tpu_custom_call.1']
    %11 = vsyncpa [#allocation3], 0
    %12 = vsyncpa [#allocation5], 0
    // Predicated region
    $region2: #{tpu_custom_call.1} parent=1 // pred_check
      _
    $region3: #{tpu_custom_call.1} parent=1 // pred_check_branch
      %14 = sbr.rel (0) target = $region5
    $region4: #{tpu_custom_call.1} parent=1 // pred_region
      _
    $region5: #{tpu_custom_call.1} parent=1 // pred_fallthru
      _
    // Predicated region
    $region6: #{tpu_custom_call.1} parent=1 // pred_check
      _
    $region7: #{tpu_custom_call.1} parent=1 // pred_check_branch
      %16 = sbr.rel (0) target = $region9
    $region8: #{tpu_custom_call.1} parent=1 // pred_region
      _
    $region9: #{tpu_custom_call.1} parent=1 // pred_fallthru
      _
    // Predicated region
    $region10: #{tpu_custom_call.1} parent=1 // pred_check
      _
    $region11: #{tpu_custom_call.1} parent=1 // pred_check_branch
      %18 = sbr.rel (0) target = $region13
    $region12: #{tpu_custom_call.1} parent=1 // pred_region
      _
    $region13: #{tpu_custom_call.1} parent=1 // pred_fallthru
      _
    // Predicated region
    $region14: #{tpu_custom_call.1} parent=1 // pred_check
      _
    $region15: #{tpu_custom_call.1} parent=1 // pred_check_branch
      %20 = sbr.rel (0) target = $region17
    $region16: #{tpu_custom_call.1} parent=1 // pred_region
      _
    $region17: #{tpu_custom_call.1} parent=1 // pred_fallthru
      _
    %v21 = vld [vmem:[%s0] sm:$0xff]
    %vm22 = vcmask 31744
    %v23 = vsel %vm22, %v21, -inf
    %24 = vmax.xlane.f32.xlu0 %v23
    %v25 = vpop.xlane.xlu0 %24
    %v26 = vsub.f32 %v21, %v25
    %v27 = vmul.f32 %v26, 1.442695
    %v28 = vpow.pop %v27
    %v29 = vsel %vm22, %v28, 0.0
    %30 = vadd.xlane.f32.xlu0 %v29
    %v31 = vpop.xlane.xlu0 %30
    %v32 = vlog2.pop %v31
    %v33 = vmul.f32 %v32, 0.6931472
    %v34 = vlaneseq
    %v35 = vand.u32 %v34, 127
    %v36 = vld [vmem:[%s2] sm:$0xff]
    %37 = vset.pattern.permute.xlu0 0
    %38 = vperm.xlu0 %37, %v36
    %v39 = vpop.permute.xlu0 %38
    %vm40 = vcmp.eq.s32.totalorder %v35, %v39
    %v41 = vsel %vm40, 1, 0
    %v42 = vcvt.s32.f32 %v41
    %v43 = vmul.f32 %v42, %v26
    %v44 = vsel %vm22, %v43, 0.0
    %45 = vadd.xlane.f32.xlu0 %v44
    %v46 = vpop.xlane.xlu0 %45
    %v47 = vsub.f32 %v33, %v46
    %v48 = vld [vmem:[%s3] sm:$0xf]
    %v50 = vsel %vm22, %v42, 0
    %vm52 = vcmask 1043456
    %v54 = vsel %vm52, %v48, 0
    %56 = vmatprep.subr.mxu0 0.0
    %57 = vmatpush1.msra.mxu0 %v54
    %58 = vmatprep.subr.mxu0 0.0
    %59 = vmatpush1.msra.mxu0 0.0
    %60 = vmatprep.subr.mxu0 0.0
    %61 = vmatpush1.msra.mxu0 0.0
    %62 = vmatprep.subr.mxu0 0.0
    %63 = vmatpush1.msra.mxu0 0.0
    %64 = vmatprep.subr.mxu0 0.0
    %65 = vmatpush1.msra.mxu0 0.0
    %66 = vmatprep.subr.mxu0 0.0
    %67 = vmatpush1.msra.mxu0 0.0
    %68 = vmatprep.subr.mxu0 0.0
    %69 = vmatpush1.msra.mxu0 0.0
    %70 = vmatprep.subr.mxu0 0.0
    %71 = vmatpush1.msra.mxu0 0.0
    %72 = vmatprep.subr.mxu0 0.0
    %73 = vmatpush1.msra.mxu0 0.0
    %74 = vmatprep.subr.mxu0 0.0
    %75 = vmatpush1.msra.mxu0 0.0
    %76 = vmatprep.subr.mxu0 0.0
    %77 = vmatpush1.msra.mxu0 0.0
    %78 = vmatprep.subr.mxu0 0.0
    %79 = vmatpush1.msra.mxu0 0.0
    %80 = vmatprep.subr.mxu0 0.0
    %81 = vmatpush1.msra.mxu0 0.0
    %82 = vmatprep.subr.mxu0 0.0
    %83 = vmatpush1.msra.mxu0 0.0
    %84 = vmatprep.subr.mxu0 0.0
    %85 = vmatpush1.msra.mxu0 0.0
    %86 = vmatprep.subr.mxu0 0.0
    %87 = vmatpush1.msra.mxu0 0.0
    %88 = vmatprep.subr.mxu0 0.0
    %89 = vmatpush1.msra.mxu0 0.0
    %90 = vmatprep.subr.mxu0 0.0
    %91 = vmatpush1.msra.mxu0 0.0
    %92 = vmatprep.subr.mxu0 0.0
    %93 = vmatpush1.msra.mxu0 0.0
    %94 = vmatprep.subr.mxu0 0.0
    %95 = vmatpush1.msra.mxu0 0.0
    %96 = vmatprep.subr.mxu0 0.0
    %97 = vmatpush1.msra.mxu0 0.0
    %98 = vmatprep.subr.mxu0 0.0
    %99 = vmatpush1.msra.mxu0 0.0
    %100 = vmatprep.subr.mxu0 0.0
    %101 = vmatpush1.msra.mxu0 0.0
    %102 = vmatprep.subr.mxu0 0.0
    %103 = vmatpush1.msra.mxu0 0.0
    %104 = vmatprep.subr.mxu0 0.0
    %105 = vmatpush1.msra.mxu0 0.0
    %106 = vmatprep.subr.mxu0 0.0
    %107 = vmatpush1.msra.mxu0 0.0
    %108 = vmatprep.subr.mxu0 0.0
    %109 = vmatpush1.msra.mxu0 0.0
    %110 = vmatprep.subr.mxu0 0.0
    %111 = vmatpush1.msra.mxu0 0.0
    %112 = vmatprep.subr.mxu0 0.0
    %113 = vmatpush1.msra.mxu0 0.0
    %114 = vmatprep.subr.mxu0 0.0
    %115 = vmatpush1.msra.mxu0 0.0
    %116 = vmatprep.subr.mxu0 0.0
    %117 = vmatpush1.msra.mxu0 0.0
    %118 = vmatprep.subr.mxu0 0.0
    %119 = vmatpush1.msra.mxu0 0.0
    %120 = vmatprep.mubr.f32.mxu0 0.0
    %121 = vmatmul.mubr.f32.gmra.mrb[0].mxu0 %v50
    %v122 = vpop.f32.mrb[0].mxu0
    %v123 = vadd.f32 0.0, %v122
    %v124 = vpop.f32.mrb[0].mxu0
    %125 = vdwg.mxu0
    %v126 = vld [vmem:[%s1] sm:$0xff]
    %v127 = vmul.f32 %v126, %v126
    %vm128 = vcmask 261120
    %v129 = vsel %vm128, %v127, 0.0
    %130 = vadd.xlane.f32.xlu0 %v129
    %v131 = vpop.xlane.xlu0 %130
    %v132 = vmul.f32 %v123, %v123
    %v133 = vsel %vm128, %v132, 0.0
    %134 = vadd.xlane.f32.xlu0 %v133
    %v135 = vpop.xlane.xlu0 %134
    %v136 = vmul.f32 %v126, %v123
    %v137 = vsel %vm128, %v136, 0.0
    %138 = vadd.xlane.f32.xlu0 %v137
    %v139 = vpop.xlane.xlu0 %138
    %v140 = vand.u32 2147483647, %v139
    %v141 = vadd.f32 %v131, 1e-06
    %v142 = vadd.f32 %v135, 1e-06
    %v143 = vmul.f32 %v141, %v142
    %v144 = vrsqrt.pop %v143
    %v145 = vmul.f32 %v140, %v144
    %vm146 = vcmask 7168
    %v147 = vsel %vm146, %v47, 0.0
    %148 = vadd.xlane.f32.xlu0 %v147
    %v149 = vpop.xlane.xlu0 %148
    %v150 = vrot.slane %v149, 4
    %v151 = vadd.f32 %v149, %v150
    %v152 = vrot.slane %v151, 2
    %v153 = vadd.f32 %v151, %v152
    %v154 = vrot.slane %v153, 1
    %v155 = vadd.f32 %v153, %v154
    %s156 = vtos %v155
    %v157 = vstv %s156
    %vm158 = vcmask 0
    %159 = vst.msk [vmem:[#allocation2] sm:$0x1] %vm158, %v157
    %v160 = vsel %vm146, %v145, 0.0
    %161 = vadd.xlane.f32.xlu0 %v160
    %v162 = vpop.xlane.xlu0 %161
    %v163 = vrot.slane %v162, 4
    %v164 = vadd.f32 %v162, %v163
    %v165 = vrot.slane %v164, 2
    %v166 = vadd.f32 %v164, %v165
    %v167 = vrot.slane %v166, 1
    %v168 = vadd.f32 %v166, %v167
    %s169 = vtos %v168
    %v170 = vstv %s169
    %171 = vst.msk [vmem:[#allocation4] sm:$0x1] %vm158, %v170
    // Predicated region
    $region18: #{tpu_custom_call.1} parent=1 // pred_check
      _
    $region19: #{tpu_custom_call.1} parent=1 // pred_check_branch
      %173 = sbr.rel (0) target = $region21
    $region20: #{tpu_custom_call.1} parent=1 // pred_region
      %s175 = ssub.s32 16, 16
      %176 = vsyncadd [#allocation3], %s175
      %s178 = sshll.u32 [#allocation2], 4
      %s179 = int_to_ptr.vmem [resolvable:$true] %s178
      %181 = dma.vmem_to_hbm [thread:$0]  %s179, 16, %s4, [#allocation3]
    $region21: #{tpu_custom_call.1} parent=1 // pred_fallthru
      _
    // Predicated region
    $region22: #{tpu_custom_call.1} parent=1 // pred_check
      _
    $region23: #{tpu_custom_call.1} parent=1 // pred_check_branch
      %183 = sbr.rel (0) target = $region25
    $region24: #{tpu_custom_call.1} parent=1 // pred_region
      %s185 = ssub.s32 16, 16
      %186 = vsyncadd [#allocation5], %s185
      %s188 = sshll.u32 [#allocation4], 4
      %s189 = int_to_ptr.vmem [resolvable:$true] %s188
      %191 = dma.vmem_to_hbm [thread:$0]  %s189, 16, %s5, [#allocation5]
    $region25: #{tpu_custom_call.1} parent=1 // pred_fallthru
      _
    // Predicated region
    $region26: #{tpu_custom_call.1} parent=1 // pred_check
      _
    $region27: #{tpu_custom_call.1} parent=1 // pred_check_branch
      %193 = sbr.rel (0) target = $region29
    $region28: #{tpu_custom_call.1} parent=1 // pred_region
      %194 = dma.done [#allocation3], 16
    $region29: #{tpu_custom_call.1} parent=1 // pred_fallthru
      _
    // Predicated region
    $region30: #{tpu_custom_call.1} parent=1 // pred_check
      _
    $region31: #{tpu_custom_call.1} parent=1 // pred_check_branch
      %196 = sbr.rel (0) target = $region33
    $region32: #{tpu_custom_call.1} parent=1 // pred_region
      %197 = dma.done [#allocation5], 16
    $region33: #{tpu_custom_call.1} parent=1 // pred_fallthru
      _
    %198 = vsyncpa [#allocation3], 1
    %199 = vsyncpa [#allocation5], 1

</llo_original>
